<compile_context>
chip_gen: v6e
topology: v6e:2x2x1
jax: 0.10.0
libtpu: 0.0.40
codegen_flags: <defaults>
</compile_context>

<pallas_src>
import functools

import jax
import jax.numpy as jnp
from jax.experimental import pallas as pl
from jax.experimental.pallas import tpu as pltpu


def _mean_kernel(x_ref, o_ref, acc_ref, *, inv_count):
    t = pl.program_id(1)  # reduction (time) axis -- last grid axis

    @pl.when(t == 0)
    def _():
        acc_ref[...] = jnp.zeros_like(acc_ref)

    # Partial sum over this time tile (accumulate in f32).
    acc_ref[...] += jnp.sum(x_ref[...].astype(jnp.float32), axis=0)

    @pl.when(t == pl.num_programs(1) - 1)
    def _():
        o_ref[...] = (acc_ref[...] * inv_count).astype(o_ref.dtype)


def _lane_block(size, max_lanes=1024):
    """Largest multiple of 128 dividing `size` (capped), else full extent."""
    if size % 128 != 0:
        return size
    best, cand = 128, 128
    while cand <= min(size, max_lanes):
        if size % cand == 0:
            best = cand
        cand += 128
    return best


def _time_block(t_steps, batch, lanes, dtype_bytes=4, max_tile_bytes=2 << 20):
    """Largest divisor of t_steps keeping the streamed x tile <= ~2 MiB
    (safe for v7x's 64 MiB VMEM with double buffering)."""
    best = 1
    for cand in range(1, t_steps + 1):
        if t_steps % cand != 0:
            continue
        if cand * batch * lanes * dtype_bytes > max_tile_bytes:
            break
        best = cand
    return best


def mean_module_forward(x, last_index):
    """x: (seq, batch, size).  Returns (x[last_index:].mean(axis=0), ())."""
    x_tail = x[last_index:]  # static slice, same as torch x[last_index:]
    t_steps, batch, size = x_tail.shape
    lt = _lane_block(size)
    tb = _time_block(t_steps, batch, lt)
    grid = (size // lt, t_steps // tb)  # (parallel lane tiles, arbitrary time)

    kernel = functools.partial(_mean_kernel, inv_count=1.0 / t_steps)
    out = pl.pallas_call(
        kernel,
        out_shape=jax.ShapeDtypeStruct((batch, size), x.dtype),
        grid_spec=pltpu.PrefetchScalarGridSpec(
            num_scalar_prefetch=0,
            grid=grid,
            in_specs=[pl.BlockSpec((tb, batch, lt), lambda j, t: (t, 0, j))],
            out_specs=pl.BlockSpec((batch, lt), lambda j, t: (0, j)),
            scratch_shapes=[pltpu.VMEM((batch, lt), jnp.float32)],
        ),
        compiler_params=pltpu.CompilerParams(
            dimension_semantics=("parallel", "arbitrary"),
        ),
    )(x_tail)
    return out, ()


def mean_module_reference(x, last_index):
    return jnp.mean(x[last_index:], axis=0), ()


if __name__ == "__main__":
    SEQ, BATCH, SIZE = 8, 2, 128  # seq=8, batch=2, lane-dense hidden=128
    LAST_INDEX = 3

    key = jax.random.PRNGKey(0)
    x = jax.random.normal(key, (SEQ, BATCH, SIZE), jnp.float32)

    out, state = mean_module_forward(x, LAST_INDEX)
    jax.block_until_ready(out)

    ref, _ = mean_module_reference(x, LAST_INDEX)
    assert out.shape == (BATCH, SIZE)
    assert state == ()
    assert jnp.allclose(out, ref, atol=1e-5, rtol=1e-5), "mean mismatch"

    print("KERNEL_OK")
</pallas_src>

<mosaic_0001>
module attributes {stable_mosaic.version = 11 : i64} {
  func.func @_mean_kernel(%arg0: i32, %arg1: i32, %arg2: memref<5x2x128xf32, #tpu.memory_space<vmem>>, %arg3: memref<2x128xf32, #tpu.memory_space<vmem>>, %arg4: memref<2x128xf32, #tpu.memory_space<vmem>>) attributes {dimension_semantics = [#tpu.dimension_semantics<parallel>, #tpu.dimension_semantics<arbitrary>], iteration_bounds = array<i64: 1, 1>, scalar_prefetch = 0 : i64, scratch_operands = 1 : i64, tpu.core_type = #tpu.core_type<tc>, window_params = [{transform_indices = @transform_0, window_bounds = array<i64: 5, 2, 128>}, {transform_indices = @transform_1, window_bounds = array<i64: 2, 128>}]} {
    %c0_i32 = arith.constant 0 : i32
    %0 = arith.cmpi eq, %arg1, %c0_i32 : i32
    %1 = arith.extui %0 : i1 to i32
    %c0_i32_0 = arith.constant 0 : i32
    %2 = arith.cmpi ne, %1, %c0_i32_0 : i32
    scf.if %2 {
      %cst_9 = arith.constant 0.000000e+00 : f32
      %11 = vector.broadcast %cst_9 : f32 to vector<2x128xf32>
      %c0_10 = arith.constant 0 : index
      %c0_11 = arith.constant 0 : index
      %12 = vector.load %arg4[%c0_10, %c0_11] : memref<2x128xf32, #tpu.memory_space<vmem>>, vector<2x128xf32>
      tpu.vector_store %arg4[%c0_10, %c0_11], %11 {strides = array<i32>} : memref<2x128xf32, #tpu.memory_space<vmem>>, vector<2x128xf32>,
    } else {
    }
    %c0 = arith.constant 0 : index
    %c0_1 = arith.constant 0 : index
    %3 = vector.load %arg4[%c0, %c0_1] : memref<2x128xf32, #tpu.memory_space<vmem>>, vector<2x128xf32>
    %c0_2 = arith.constant 0 : index
    %c0_3 = arith.constant 0 : index
    %c0_4 = arith.constant 0 : index
    %4 = vector.load %arg2[%c0_2, %c0_3, %c0_4] : memref<5x2x128xf32, #tpu.memory_space<vmem>>, vector<5x2x128xf32>
    %cst = arith.constant dense<0.000000e+00> : vector<2x128xf32>
    %5 = vector.multi_reduction <add>, %4, %cst [0] : vector<5x2x128xf32> to vector<2x128xf32>
    %6 = arith.addf %3, %5 : vector<2x128xf32>
    %c0_5 = arith.constant 0 : index
    %c0_6 = arith.constant 0 : index
    %7 = vector.load %arg4[%c0_5, %c0_6] : memref<2x128xf32, #tpu.memory_space<vmem>>, vector<2x128xf32>
    tpu.vector_store %arg4[%c0_5, %c0_6], %6 {strides = array<i32>} : memref<2x128xf32, #tpu.memory_space<vmem>>, vector<2x128xf32>,
    %c0_i32_7 = arith.constant 0 : i32
    %8 = arith.cmpi eq, %arg1, %c0_i32_7 : i32
    %9 = arith.extui %8 : i1 to i32
    %c0_i32_8 = arith.constant 0 : i32
    %10 = arith.cmpi ne, %9, %c0_i32_8 : i32
    scf.if %10 {
      %c0_9 = arith.constant 0 : index
      %c0_10 = arith.constant 0 : index
      %11 = vector.load %arg4[%c0_9, %c0_10] : memref<2x128xf32, #tpu.memory_space<vmem>>, vector<2x128xf32>
      %cst_11 = arith.constant 2.000000e-01 : f32
      %12 = vector.broadcast %cst_11 : f32 to vector<2x128xf32>
      %13 = arith.mulf %11, %12 : vector<2x128xf32>
      %c0_12 = arith.constant 0 : index
      %c0_13 = arith.constant 0 : index
      %14 = vector.load %arg3[%c0_12, %c0_13] : memref<2x128xf32, #tpu.memory_space<vmem>>, vector<2x128xf32>
      tpu.vector_store %arg3[%c0_12, %c0_13], %13 {strides = array<i32>} : memref<2x128xf32, #tpu.memory_space<vmem>>, vector<2x128xf32>,
    } else {
    }
    return
  }
  func.func @transform_0(%arg0: i32, %arg1: i32) -> (i32, i32, i32) {
    %c0_i32 = arith.constant 0 : i32
    %c0_i32_0 = arith.constant 0 : i32
    return %arg1, %c0_i32, %arg0 : i32, i32, i32
  }
  func.func @transform_1(%arg0: i32, %arg1: i32) -> (i32, i32) {
    %c0_i32 = arith.constant 0 : i32
    %c0_i32_0 = arith.constant 0 : i32
    return %c0_i32, %arg0 : i32, i32
  }
}

</mosaic_0001>

<llo_original>
// kernel: tpu_custom_call.1
$region0: #{tpu_custom_call.1}
  #allocation0 [shape = 'u32[]', space=smem, size = 0x4, offset = 0x4, fixed_abs, tag = 'smem constant byte address 0x4 - core index']
  #allocation1 [shape = 'u32[144,128]{1,0:T(1,128)}', space=vmem, size = 0x12000, scoped, tag = 'internal scratch']
  #allocation2 [shape = 'f32[2,128]{1,0:T(2,128)}', space=vmem, size = 0x400, scoped, tag = 'scratch operand']
  %s0 = inlined_call_operand.hbm [shape: f32[5,2,128], index: 0, kind: input, shape index: {}]
  %s1 = inlined_call_operand.hbm [shape: f32[2,128], index: 1, kind: output, shape index: {}]
  %s2 = sld [smem:[#allocation0]]
  $region26: #{tpu_custom_call.1} parent=0
    _
  %s4 = ssub.s32 1, %s2
  %s5 = scalar_select 0, %s4, %s2
  $region1: #{tpu_custom_call.1} parent=0
    #allocation3 [shape = 'u8[5120]{0}', space=vmem, size = 0x1400, scoped, tag = 'input window, operand 0, single buffered']
    #allocation4 [shape = 's32[1]{0}', space=sflag, size = 0x4, scoped, tag = 'scoped memory for tpu_custom_call.1']
    #allocation5 [shape = 's32[1]{0}', space=sflag, size = 0x4, scoped, tag = 'scoped memory for tpu_custom_call.1']
    #allocation6 [shape = 'u8[1024]{0}', space=vmem, size = 0x400, scoped, tag = 'output window, operand 0, single buffered']
    %6 = vsyncpa [#allocation4], 0
    %7 = vsyncpa [#allocation5], 0
    // Predicated region
    $region2: #{tpu_custom_call.1} parent=1 // pred_check
      _
    $region3: #{tpu_custom_call.1} parent=1 // pred_check_branch
      %9 = sbr.rel (0) target = $region5
    $region4: #{tpu_custom_call.1} parent=1 // pred_region
      %s11 = ssub.s32 160, 160
      %12 = vsyncadd [#allocation4], %s11
      %s13 = sshll.u32 [#allocation3], 4
      %s14 = int_to_ptr.vmem [resolvable:$true] %s13
      %19 = dma.hbm_to_vmem [thread:$0]  %s0, 160, %s14, [#allocation4], 32, 32, 2
    $region5: #{tpu_custom_call.1} parent=1 // pred_fallthru
      _
    // Predicated region
    $region6: #{tpu_custom_call.1} parent=1 // pred_check
      _
    $region7: #{tpu_custom_call.1} parent=1 // pred_check_branch
      %21 = sbr.rel (0) target = $region9
    $region8: #{tpu_custom_call.1} parent=1 // pred_region
      %22 = dma.done [#allocation4], 160
    $region9: #{tpu_custom_call.1} parent=1 // pred_fallthru
      _
    %p23 = scmp.eq.s32.totalorder 0, 0
    // Predicated region
    $region10: #{tpu_custom_call.1} parent=1 // pred_check
      %p24 = pneg %p23
    $region11: #{tpu_custom_call.1} parent=1 // pred_check_branch
      %26 = sbr.rel (%p24) target = $region13
    $region12: #{tpu_custom_call.1} parent=1 // pred_region
      %27 = vst [vmem:[#allocation2] sm:$0x3] 0.0
    $region13: #{tpu_custom_call.1} parent=1 // pred_fallthru
      _
    %v28 = vld [vmem:[#allocation2] sm:$0x3]
    %v29 = vld [vmem:[#allocation3] sm:$0x3]
    %v30 = vld [vmem:[#allocation3 + $0x2] sm:$0x3]
    %v31 = vld [vmem:[#allocation3 + $0x4] sm:$0x3]
    %v32 = vld [vmem:[#allocation3 + $0x6] sm:$0x3]
    %v33 = vld [vmem:[#allocation3 + $0x8] sm:$0x3]
    %vm34 = vcmask 1041408
    %v35 = vsel %vm34, %v29, 0.0
    %v36 = vsel %vm34, %v30, 0.0
    %v37 = vadd.f32 %v35, %v36
    %v38 = vsel %vm34, %v31, 0.0
    %v39 = vadd.f32 %v37, %v38
    %v40 = vsel %vm34, %v32, 0.0
    %v41 = vadd.f32 %v39, %v40
    %v42 = vsel %vm34, %v33, 0.0
    %v43 = vadd.f32 %v41, %v42
    %v44 = vadd.f32 %v28, %v43
    %45 = vst [vmem:[#allocation2] sm:$0x3] %v44
    // Predicated region
    $region14: #{tpu_custom_call.1} parent=1 // pred_check
      %p46 = pneg %p23
    $region15: #{tpu_custom_call.1} parent=1 // pred_check_branch
      %48 = sbr.rel (%p46) target = $region17
    $region16: #{tpu_custom_call.1} parent=1 // pred_region
      %v49 = vld [vmem:[#allocation2] sm:$0x3]
      %v50 = vmul.f32 %v49, 0.2
      %51 = vst [vmem:[#allocation6] sm:$0x3] %v50
    $region17: #{tpu_custom_call.1} parent=1 // pred_fallthru
      _
    // Predicated region
    $region18: #{tpu_custom_call.1} parent=1 // pred_check
      _
    $region19: #{tpu_custom_call.1} parent=1 // pred_check_branch
      %53 = sbr.rel (0) target = $region21
    $region20: #{tpu_custom_call.1} parent=1 // pred_region
      %s55 = ssub.s32 32, 32
      %56 = vsyncadd [#allocation5], %s55
      %s58 = sshll.u32 [#allocation6], 4
      %s59 = int_to_ptr.vmem [resolvable:$true] %s58
      %61 = dma.vmem_to_hbm [thread:$0]  %s59, 32, %s1, [#allocation5]
    $region21: #{tpu_custom_call.1} parent=1 // pred_fallthru
      _
    // Predicated region
    $region22: #{tpu_custom_call.1} parent=1 // pred_check
      _
    $region23: #{tpu_custom_call.1} parent=1 // pred_check_branch
      %63 = sbr.rel (0) target = $region25
    $region24: #{tpu_custom_call.1} parent=1 // pred_region
      %64 = dma.done [#allocation5], 32
    $region25: #{tpu_custom_call.1} parent=1 // pred_fallthru
      _
    %65 = vsyncpa [#allocation4], 1
    %66 = vsyncpa [#allocation5], 1

</llo_original>
